<compile_context>
chip_gen: v6e
topology: v6e:2x2x1
jax: 0.10.0
libtpu: 0.0.40
codegen_flags: <defaults>
</compile_context>

<pallas_src>
import jax
import jax.numpy as jnp
from jax.experimental import pallas as pl
from jax.experimental.pallas import tpu as pltpu

LN_EPS = 1e-5  # torch.nn.LayerNorm default


def _ada_ln_kernel(x_ref, g_ref, b_ref, o_ref):
    """One (tile_b, tile_s, N) tile of LayerNorm + conditioning.

    x_ref : [TB, TS, N]  input rows
    g_ref : [TS, N] (B==S) or [1, N] (B==1)  gamma * ln_weight
    b_ref : same shape as g_ref               gamma * ln_bias + beta
    o_ref : [TB, TS, N]  output rows
    """
    x = x_ref[...].astype(jnp.float32)
    mean = jnp.mean(x, axis=-1, keepdims=True)
    xc = x - mean
    var = jnp.mean(xc * xc, axis=-1, keepdims=True)        # centered (robust) 2nd pass
    inv = jax.lax.rsqrt(var + LN_EPS)                       # EUP slot, off the VALU path
    g = g_ref[...].astype(jnp.float32)                      # broadcasts over TB (and TS if [1,N])
    b = b_ref[...].astype(jnp.float32)
    o_ref[...] = (g * (xc * inv) + b).astype(o_ref.dtype)


def _vmem_budgets():
    """(working-set budget, scoped vmem limit) sized per chip generation."""
    try:
        vmem = pltpu.get_tpu_info().vmem_capacity_bytes
    except Exception:  # no hw info (interpret mode, old jax) -> conservative
        vmem = 64 << 20
    if vmem >= (100 << 20):          # v5e / v6e: 128 MiB physical VMEM
        return 20 << 20, 48 << 20
    return 12 << 20, 32 << 20        # v7x-style: 64 MiB physical VMEM


def _choose_tiles(B, S, N, x_itemsize, gb_itemsize, sublane,
                  target_block_bytes, vmem_budget_bytes, g_tracks_s):
    """Pick (tile_b, tile_s) so each grid step moves ~target_block_bytes of x,
    the double-buffered working set fits the budget, and the parallel grid has
    at least 2 steps (both v7x TensorCores get work)."""
    bytes_per_row_x = N * x_itemsize
    target_rows = max(sublane, target_block_bytes // bytes_per_row_x)

    if S * bytes_per_row_x <= target_block_bytes:
        tile_s = S                                          # full-extent S block (always legal)
        tile_b = min(B, max(1, target_rows // max(S, 1)))
    else:
        tile_b = 1
        tile_s = max(sublane, (target_rows // sublane) * sublane)

    def working_set(tb, ts):
        g_rows = ts if g_tracks_s else 1
        return (2 * tb * ts * N * 2 * x_itemsize            # x + out, double-buffered
                + 2 * 2 * g_rows * N * gb_itemsize)         # g_eff + b_eff, double-buffered

    while working_set(tile_b, tile_s) > vmem_budget_bytes and tile_b > 1:
        tile_b = pl.cdiv(tile_b, 2)
    while working_set(tile_b, tile_s) > vmem_budget_bytes and tile_s > sublane:
        tile_s = max(sublane, ((tile_s // 2) // sublane) * sublane)

    # Guarantee >= 2 grid steps so a "parallel" axis can shard across 2 TCs.
    if pl.cdiv(S, tile_s) * pl.cdiv(B, tile_b) < 2:
        if B >= 2:
            tile_b = pl.cdiv(B, 2)
        elif S >= 2 * sublane:
            tile_s = sublane * pl.cdiv(pl.cdiv(S, 2), sublane)

    return tile_b, tile_s


def ada_layer_norm(x, cond, ln_w, ln_b, gamma_w, gamma_b, beta_w, beta_b,
                   *, vmem_budget_bytes=None, target_block_bytes=1 << 20):
    """x: [B, S, N], cond: [B, C]; Linear weights given torch-style as [N, C]."""
    B, S, N = x.shape
    if not (B == S or B == 1):
        raise ValueError(
            "AdaLayerNorm broadcasts gamma/beta of shape [B, N] against the "
            "normalized [B, S, N]; like the PyTorch module this requires "
            f"B == S or B == 1, got B={B}, S={S}.")

    f32 = jnp.float32
    x_itemsize = jnp.dtype(x.dtype).itemsize
    # gamma/beta stream dtype: match bf16 x to halve their HBM stream, else f32.
    gb_dtype = x.dtype if x.dtype == jnp.bfloat16 else f32
    gb_itemsize = jnp.dtype(gb_dtype).itemsize
    sublane = max(8, 32 // x_itemsize)          # 8 for f32, 16 for bf16, 32 for 8-bit

    # --- Conditioning projections: one fused tiny [C, 2N] matmul in plain XLA.
    w_fused = jnp.concatenate([gamma_w.T, beta_w.T], axis=1).astype(f32)    # [C, 2N]
    bias_fused = jnp.concatenate([gamma_b, beta_b]).astype(f32)[None, :]    # [1, 2N]
    gb = jnp.dot(cond.astype(f32), w_fused,
                 preferred_element_type=f32) + bias_fused                   # [B, 2N]
    gamma, beta = gb[:, :N], gb[:, N:]

    # --- Fold LayerNorm's elementwise affine into the modulation (exact):
    #     gamma*(xhat*w + b) + beta == (gamma*w)*xhat + (gamma*b + beta)
    g_eff = (gamma * ln_w.astype(f32)[None, :]).astype(gb_dtype)            # [B, N]
    b_eff = (gamma * ln_b.astype(f32)[None, :] + beta).astype(gb_dtype)     # [B, N]
    # NOTE: no [S, N] broadcast materialization for B == 1 — kept as [1, N].

    auto_budget, auto_limit = _vmem_budgets()
    if vmem_budget_bytes is None:
        vmem_budget_bytes, vmem_limit = auto_budget, auto_limit
    else:
        vmem_limit = max(auto_limit, 2 * vmem_budget_bytes)

    g_tracks_s = (B != 1)
    tile_b, tile_s = _choose_tiles(B, S, N, x_itemsize, gb_itemsize, sublane,
                                   target_block_bytes, vmem_budget_bytes,
                                   g_tracks_s)

    # s-tiles outer, batch-tiles inner so g/b blocks stay resident across b.
    grid = (pl.cdiv(S, tile_s), pl.cdiv(B, tile_b))

    x_spec = pl.BlockSpec((tile_b, tile_s, N), lambda j, b: (b, j, 0))
    if g_tracks_s:
        g_spec = pl.BlockSpec((tile_s, N), lambda j, b: (j, 0))
    else:
        g_spec = pl.BlockSpec((1, N), lambda j, b: (0, 0))

    g_rows_total = S if g_tracks_s else 1
    cost = pl.CostEstimate(
        flops=8 * B * S * N,
        transcendentals=B * S,                                  # rsqrt per row
        bytes_accessed=2 * B * S * N * x_itemsize + 2 * g_rows_total * N * gb_itemsize,
    )

    return pl.pallas_call(
        _ada_ln_kernel,
        out_shape=jax.ShapeDtypeStruct((B, S, N), x.dtype),
        grid=grid,
        in_specs=[x_spec, g_spec, g_spec],
        out_specs=x_spec,
        compiler_params=pltpu.CompilerParams(
            dimension_semantics=("parallel", "parallel"),
            vmem_limit_bytes=vmem_limit,
        ),
        cost_estimate=cost,
    )(x, g_eff, b_eff)


def reference(x, cond, ln_w, ln_b, gamma_w, gamma_b, beta_w, beta_b):
    mean = jnp.mean(x, axis=-1, keepdims=True)
    var = jnp.mean((x - mean) ** 2, axis=-1, keepdims=True)
    normalized = (x - mean) / jnp.sqrt(var + LN_EPS) * ln_w + ln_b
    gamma = cond @ gamma_w.T + gamma_b   # [B, N]
    beta = cond @ beta_w.T + beta_b      # [B, N]
    # Same (numpy/torch) left-padded broadcasting as the PyTorch module.
    return gamma * normalized + beta


def _make_params(key, N, C):
    kgw, kgb, kbw, kbb, klw, klb = jax.random.split(key, 6)
    ln_w = 1.0 + 0.1 * jax.random.normal(klw, (N,), dtype=jnp.float32)
    ln_b = 0.1 * jax.random.normal(klb, (N,), dtype=jnp.float32)
    bound = 1.0 / (C ** 0.5)
    gamma_w = jax.random.uniform(kgw, (N, C), minval=-bound, maxval=bound, dtype=jnp.float32)
    gamma_b = jax.random.uniform(kgb, (N,), minval=-bound, maxval=bound, dtype=jnp.float32)
    beta_w = jax.random.uniform(kbw, (N, C), minval=-bound, maxval=bound, dtype=jnp.float32)
    beta_b = jax.random.uniform(kbb, (N,), minval=-bound, maxval=bound, dtype=jnp.float32)
    return ln_w, ln_b, gamma_w, gamma_b, beta_w, beta_b


if __name__ == "__main__":
    key = jax.random.PRNGKey(0)
    k1, k2, k3, k4, k5 = jax.random.split(key, 5)

    # --- Case 1: B == S (gamma indexed by s), exercises batch tiling.
    B, S, N, C = 8, 8, 128, 32
    x = jax.random.normal(k1, (B, S, N), dtype=jnp.float32) + 0.5
    cond = jax.random.normal(k2, (B, C), dtype=jnp.float32)
    params = _make_params(k3, N, C)
    out = jax.block_until_ready(ada_layer_norm(x, cond, *params))
    ref = reference(x, cond, *params)
    assert out.shape == (B, S, N)
    assert jnp.allclose(out, ref, atol=1e-4, rtol=1e-4), "mismatch vs reference (B==S)"

    # --- Case 2: B == 1 (gamma constant, kept as [1, N]); S not a multiple of the
    #     tile, exercising the cdiv / partial-last-block path.
    B2, S2, N2, C2 = 1, 24, 128, 16
    x2 = jax.random.normal(k4, (B2, S2, N2), dtype=jnp.float32) - 0.25
    cond2 = jax.random.normal(k5, (B2, C2), dtype=jnp.float32)
    params2 = _make_params(k3, N2, C2)
    out2 = jax.block_until_ready(ada_layer_norm(x2, cond2, *params2))
    ref2 = reference(x2, cond2, *params2)
    assert out2.shape == (B2, S2, N2)
    assert jnp.allclose(out2, ref2, atol=1e-4, rtol=1e-4), "mismatch vs reference (B==1)"

    print("KERNEL_OK")
</pallas_src>

<mosaic_0001>
module attributes {stable_mosaic.version = 11 : i64} {
  func.func @_ada_ln_kernel(%arg0: i32, %arg1: i32, %arg2: memref<4x8x128xf32, #tpu.memory_space<vmem>>, %arg3: memref<8x128xf32, #tpu.memory_space<vmem>>, %arg4: memref<8x128xf32, #tpu.memory_space<vmem>>, %arg5: memref<4x8x128xf32, #tpu.memory_space<vmem>>) attributes {dimension_semantics = [#tpu.dimension_semantics<parallel>, #tpu.dimension_semantics<parallel>], iteration_bounds = array<i64: 1, 2>, scalar_prefetch = 0 : i64, scratch_operands = 0 : i64, tpu.core_type = #tpu.core_type<tc>, window_params = [{transform_indices = @transform_0, window_bounds = array<i64: 4, 8, 128>}, {transform_indices = @transform_1, window_bounds = array<i64: 8, 128>}, {transform_indices = @transform_2, window_bounds = array<i64: 8, 128>}, {transform_indices = @transform_3, window_bounds = array<i64: 4, 8, 128>}]} {
    %c0 = arith.constant 0 : index
    %c0_0 = arith.constant 0 : index
    %c0_1 = arith.constant 0 : index
    %0 = vector.load %arg2[%c0, %c0_0, %c0_1] : memref<4x8x128xf32, #tpu.memory_space<vmem>>, vector<4x8x128xf32>
    %cst = arith.constant dense<0.000000e+00> : vector<4x8xf32>
    %1 = vector.multi_reduction <add>, %0, %cst [2] : vector<4x8x128xf32> to vector<4x8xf32>
    %2 = vector.shape_cast %1 : vector<4x8xf32> to vector<4x8x1xf32>
    %cst_2 = arith.constant 1.280000e+02 : f32
    %3 = vector.broadcast %cst_2 : f32 to vector<4x8x1xf32>
    %4 = arith.divf %2, %3 : vector<4x8x1xf32>
    %5 = vector.broadcast %4 : vector<4x8x1xf32> to vector<4x8x128xf32>
    %6 = arith.subf %0, %5 : vector<4x8x128xf32>
    %7 = arith.mulf %6, %6 : vector<4x8x128xf32>
    %cst_3 = arith.constant dense<0.000000e+00> : vector<4x8xf32>
    %8 = vector.multi_reduction <add>, %7, %cst_3 [2] : vector<4x8x128xf32> to vector<4x8xf32>
    %9 = vector.shape_cast %8 : vector<4x8xf32> to vector<4x8x1xf32>
    %cst_4 = arith.constant 1.280000e+02 : f32
    %10 = vector.broadcast %cst_4 : f32 to vector<4x8x1xf32>
    %11 = arith.divf %9, %10 : vector<4x8x1xf32>
    %cst_5 = arith.constant 9.99999974E-6 : f32
    %12 = vector.broadcast %cst_5 : f32 to vector<4x8x1xf32>
    %13 = arith.addf %11, %12 : vector<4x8x1xf32>
    %14 = math.rsqrt %13 : vector<4x8x1xf32>
    %c0_6 = arith.constant 0 : index
    %c0_7 = arith.constant 0 : index
    %15 = vector.load %arg3[%c0_6, %c0_7] : memref<8x128xf32, #tpu.memory_space<vmem>>, vector<8x128xf32>
    %c0_8 = arith.constant 0 : index
    %c0_9 = arith.constant 0 : index
    %16 = vector.load %arg4[%c0_8, %c0_9] : memref<8x128xf32, #tpu.memory_space<vmem>>, vector<8x128xf32>
    %17 = vector.broadcast %14 : vector<4x8x1xf32> to vector<4x8x128xf32>
    %18 = arith.mulf %6, %17 : vector<4x8x128xf32>
    %19 = vector.shape_cast %15 : vector<8x128xf32> to vector<1x8x128xf32>
    %20 = vector.broadcast %19 : vector<1x8x128xf32> to vector<4x8x128xf32>
    %21 = arith.mulf %20, %18 : vector<4x8x128xf32>
    %22 = vector.shape_cast %16 : vector<8x128xf32> to vector<1x8x128xf32>
    %23 = vector.broadcast %22 : vector<1x8x128xf32> to vector<4x8x128xf32>
    %24 = arith.addf %21, %23 : vector<4x8x128xf32>
    %c0_10 = arith.constant 0 : index
    %c0_11 = arith.constant 0 : index
    %c0_12 = arith.constant 0 : index
    %25 = vector.load %arg5[%c0_10, %c0_11, %c0_12] : memref<4x8x128xf32, #tpu.memory_space<vmem>>, vector<4x8x128xf32>
    tpu.vector_store %arg5[%c0_10, %c0_11, %c0_12], %24 {strides = array<i32>} : memref<4x8x128xf32, #tpu.memory_space<vmem>>, vector<4x8x128xf32>,
    return
  }
  func.func @transform_0(%arg0: i32, %arg1: i32) -> (i32, i32, i32) {
    %c0_i32 = arith.constant 0 : i32
    %c0_i32_0 = arith.constant 0 : i32
    return %arg1, %arg0, %c0_i32 : i32, i32, i32
  }
  func.func @transform_1(%arg0: i32, %arg1: i32) -> (i32, i32) {
    %c0_i32 = arith.constant 0 : i32
    %c0_i32_0 = arith.constant 0 : i32
    return %arg0, %c0_i32 : i32, i32
  }
  func.func @transform_2(%arg0: i32, %arg1: i32) -> (i32, i32) {
    %c0_i32 = arith.constant 0 : i32
    %c0_i32_0 = arith.constant 0 : i32
    return %arg0, %c0_i32 : i32, i32
  }
  func.func @transform_3(%arg0: i32, %arg1: i32) -> (i32, i32, i32) {
    %c0_i32 = arith.constant 0 : i32
    %c0_i32_0 = arith.constant 0 : i32
    return %arg1, %arg0, %c0_i32 : i32, i32, i32
  }
}

</mosaic_0001>

<llo_original>
// kernel: tpu_custom_call.1
$region0: #{tpu_custom_call.1}
  #allocation0 [shape = 'u32[]', space=smem, size = 0x4, offset = 0x4, fixed_abs, tag = 'smem constant byte address 0x4 - core index']
  #allocation1 [shape = 'u32[144,128]{1,0:T(1,128)}', space=vmem, size = 0x12000, scoped, tag = 'internal scratch']
  %s0 = inlined_call_operand.hbm [shape: f32[8,8,128], index: 0, kind: input, shape index: {}]
  %s1 = inlined_call_operand.hbm [shape: f32[8,128], index: 1, kind: input, shape index: {}]
  %s2 = inlined_call_operand.hbm [shape: f32[8,128], index: 2, kind: input, shape index: {}]
  %s3 = inlined_call_operand.hbm [shape: f32[8,8,128], index: 3, kind: output, shape index: {}]
  %s4 = sld [smem:[#allocation0]]
  $region57: #{tpu_custom_call.1} parent=0
    _
  %s6 = ssub.s32 1, %s4
  %s7 = scalar_select 0, %s6, %s4
  $region1: #{tpu_custom_call.1} parent=0
    #allocation2 [shape = 'u8[32768]{0}', space=vmem, size = 0x8000, scoped, tag = 'input window, operand 0']
    #allocation3 [shape = 's32[2]{0}', space=sflag, size = 0x8, scoped, tag = 'scoped memory for tpu_custom_call.1']
    #allocation4 [shape = 's32[2]{0}', space=sflag, size = 0x8, scoped, tag = 'scoped memory for tpu_custom_call.1']
    #allocation5 [shape = 'u8[4096]{0}', space=vmem, size = 0x1000, scoped, tag = 'input window, operand 1, single buffered']
    #allocation6 [shape = 's32[1]{0}', space=sflag, size = 0x4, scoped, tag = 'scoped memory for tpu_custom_call.1']
    #allocation7 [shape = 'u8[4096]{0}', space=vmem, size = 0x1000, scoped, tag = 'input window, operand 2, single buffered']
    #allocation8 [shape = 'u8[32768]{0}', space=vmem, size = 0x8000, scoped, tag = 'output window, operand 0']
    %8 = vsyncpa [#allocation3], 0
    %s9 = scalar_lea.sflag [#allocation3], 1
    %10 = vsyncpa %s9, 0
    %11 = vsyncpa [#allocation6], 0
    %12 = vsyncpa [#allocation4], 0
    %s13 = scalar_lea.sflag [#allocation4], 1
    %14 = vsyncpa %s13, 0
    loop: start=0, step=1, limit=4
    $region2: #{tpu_custom_call.1} parent=1 // loop_pre_header
      _
    $region3: #{tpu_custom_call.1} parent=1 // loop_header
      %s16 = sphi 0, %s20
      %p17 = scmp.ge.s32.totalorder %s16, 4
      %s23 = sphi 0, %s35
      %s24 = sphi 0, %s31
      %s25 = sphi 0, %s23
      %s26 = sphi 0, %s24
      %s27 = sphi 0, %s25
      %s28 = sphi 0, %s26
      %s40 = sphi 0, %s42
      %s43 = sphi 0, %s40
      %s44 = sphi 0, %s43
      %s60 = sphi 0, %s44
      %s66 = sphi 0, %s68
      %s69 = sphi 0, %s66
      %s70 = sphi 0, %s69
      %s86 = sphi 0, %s70
      %s92 = sphi 0, %s94
      %s95 = sphi 0, %s92
      %s96 = sphi 0, %s95
      %s112 = sphi 0, %s96
      %s120 = sphi 0, %s122
      %s123 = sphi 0, %s120
      %s124 = sphi 0, %s123
      %s140 = sphi 0, %s124
    $region4: #{tpu_custom_call.1} parent=1 // loop_header_branch
      %19 = sbr.rel (%p17) target = $region8
    $region5: #{tpu_custom_call.1} parent=1 // loop_body
      %s21 = ssub.s32 %s16, 1
      %s22 = ssub.s32 %s16, 2
      %s29 = sadd.s32 1, %s24
      %p30 = scmp.ge.s32.totalorder %s29, 2
      %s31 = scalar_select %p30, 0, %s29
      %s32 = sadd.s32 1, %s23
      %s33 = scalar_select %p30, %s32, %s23
      %p34 = scmp.ge.s32.totalorder %s33, 1
      %s35 = scalar_select %p34, 0, %s33
      %s36 = ssub.s32 %s24, %s31
      %s37 = ssub.s32 %s23, %s35
      %s38 = sor.u32 %s36, %s37
      %p39 = scmp.eq.s32.totalorder %s38, 0
      %s41 = sadd.s32 %s40, 1
      %s42 = scalar_select %p39, %s40, %s41
      %p45 = pneg %p39
      %p46 = scmp.eq.s32.totalorder %s16, 1
      %p47 = por %p45, %p46
      %p48 = scmp.ne.s32.totalorder %s40, %s43
      %p49 = scmp.eq.s32.totalorder %s16, 0
      %p50 = por %p48, %p49
      %p51 = scmp.ne.s32.totalorder %s40, %s43
      %p52 = scmp.eq.s32.totalorder %s21, 1
      %p53 = por %p51, %p52
      %p54 = scmp.ne.s32.totalorder %s43, %s44
      %p55 = scmp.eq.s32.totalorder %s21, 0
      %p56 = por %p54, %p55
      %p57 = scmp.ne.s32.totalorder %s43, %s44
      %p58 = scmp.eq.s32.totalorder %s22, 1
      %p59 = por %p57, %p58
      %p61 = scmp.ne.s32.totalorder %s44, %s60
      %p62 = scmp.eq.s32.totalorder %s22, 0
      %p63 = por %p61, %p62
      %s64 = ssub.s32 %s23, %s35
      %p65 = scmp.eq.s32.totalorder %s64, 0
      %s67 = sadd.s32 %s66, 1
      %s68 = scalar_select %p65, %s66, %s67
      %p71 = pneg %p65
      %p72 = scmp.eq.s32.totalorder %s16, 1
      %p73 = por %p71, %p72
      %p74 = scmp.ne.s32.totalorder %s66, %s69
      %p75 = scmp.eq.s32.totalorder %s16, 0
      %p76 = por %p74, %p75
      %p77 = scmp.ne.s32.totalorder %s66, %s69
      %p78 = scmp.eq.s32.totalorder %s21, 1
      %p79 = por %p77, %p78
      %p80 = scmp.ne.s32.totalorder %s69, %s70
      %p81 = scmp.eq.s32.totalorder %s21, 0
      %p82 = por %p80, %p81
      %p83 = scmp.ne.s32.totalorder %s69, %s70
      %p84 = scmp.eq.s32.totalorder %s22, 1
      %p85 = por %p83, %p84
      %p87 = scmp.ne.s32.totalorder %s70, %s86
      %p88 = scmp.eq.s32.totalorder %s22, 0
      %p89 = por %p87, %p88
      %s90 = ssub.s32 %s23, %s35
      %p91 = scmp.eq.s32.totalorder %s90, 0
      %s93 = sadd.s32 %s92, 1
      %s94 = scalar_select %p91, %s92, %s93
      %p97 = pneg %p91
      %p98 = scmp.eq.s32.totalorder %s16, 1
      %p99 = por %p97, %p98
      %p100 = scmp.ne.s32.totalorder %s92, %s95
      %p101 = scmp.eq.s32.totalorder %s16, 0
      %p102 = por %p100, %p101
      %p103 = scmp.ne.s32.totalorder %s92, %s95
      %p104 = scmp.eq.s32.totalorder %s21, 1
      %p105 = por %p103, %p104
      %p106 = scmp.ne.s32.totalorder %s95, %s96
      %p107 = scmp.eq.s32.totalorder %s21, 0
      %p108 = por %p106, %p107
      %p109 = scmp.ne.s32.totalorder %s95, %s96
      %p110 = scmp.eq.s32.totalorder %s22, 1
      %p111 = por %p109, %p110
      %p113 = scmp.ne.s32.totalorder %s96, %s112
      %p114 = scmp.eq.s32.totalorder %s22, 0
      %p115 = por %p113, %p114
      %s116 = ssub.s32 %s24, %s31
      %s117 = ssub.s32 %s23, %s35
      %s118 = sor.u32 %s116, %s117
      %p119 = scmp.eq.s32.totalorder %s118, 0
      %s121 = sadd.s32 %s120, 1
      %s122 = scalar_select %p119, %s120, %s121
      %p125 = pneg %p119
      %p126 = scmp.eq.s32.totalorder %s16, 1
      %p127 = por %p125, %p126
      %p128 = scmp.ne.s32.totalorder %s120, %s123
      %p129 = scmp.eq.s32.totalorder %s16, 0
      %p130 = por %p128, %p129
      %p131 = scmp.ne.s32.totalorder %s120, %s123
      %p132 = scmp.eq.s32.totalorder %s21, 1
      %p133 = por %p131, %p132
      %p134 = scmp.ne.s32.totalorder %s123, %s124
      %p135 = scmp.eq.s32.totalorder %s21, 0
      %p136 = por %p134, %p135
      %p137 = scmp.ne.s32.totalorder %s123, %s124
      %p138 = scmp.eq.s32.totalorder %s22, 1
      %p139 = por %p137, %p138
      %p141 = scmp.ne.s32.totalorder %s124, %s140
      %p142 = scmp.eq.s32.totalorder %s22, 0
      %p143 = por %p141, %p142
      %p144 = scmp.le.s32.totalorder 1, %s16
      %p145 = scmp.lt.s32.totalorder %s16, 3
      %p146 = pnand %p144, %p145
      %p147 = pneg %p146
      // Predicated region
      $region9: #{tpu_custom_call.1} parent=5 // pred_check
        _
      $region10: #{tpu_custom_call.1} parent=5 // pred_check_branch
        %149 = sbr.rel (%p146) target = $region12
      $region11: #{tpu_custom_call.1} parent=5 // pred_region
        %s150 = ssub.s32 %s16, 1
        // Predicated region
        $region13: #{tpu_custom_call.1} parent=11 // pred_check
          %p151 = pneg %p82
        $region14: #{tpu_custom_call.1} parent=11 // pred_check_branch
          %153 = sbr.rel (%p151) target = $region16
        $region15: #{tpu_custom_call.1} parent=11 // pred_region
          %s155 = ssub.s32 128, 128
          %156 = vsyncadd [#allocation6], %s155
          %s157 = smul.addr %s25, 128
          %s158 = scalar_lea.hbm %s1, %s157
          %s160 = sshll.u32 [#allocation5], 4
          %s161 = int_to_ptr.vmem [resolvable:$true] %s160
          %163 = dma.hbm_to_vmem [thread:$0]  %s158, 128, %s161, [#allocation6]
        $region16: #{tpu_custom_call.1} parent=11 // pred_fallthru
          _
        // Predicated region
        $region17: #{tpu_custom_call.1} parent=11 // pred_check
          %p164 = pneg %p108
        $region18: #{tpu_custom_call.1} parent=11 // pred_check_branch
          %166 = sbr.rel (%p164) target = $region20
        $region19: #{tpu_custom_call.1} parent=11 // pred_region
          %s168 = ssub.s32 128, 128
          %169 = vsyncadd [#allocation6], %s168
          %s170 = smul.addr %s25, 128
          %s171 = scalar_lea.hbm %s2, %s170
          %s173 = sshll.u32 [#allocation7], 4
          %s174 = int_to_ptr.vmem [resolvable:$true] %s173
          %176 = dma.hbm_to_vmem [thread:$0]  %s171, 128, %s174, [#allocation6]
        $region20: #{tpu_custom_call.1} parent=11 // pred_fallthru
          _
      $region12: #{tpu_custom_call.1} parent=5 // pred_fallthru
        _
      %p177 = scmp.lt.s32.totalorder %s16, 2
      // Predicated region
      $region21: #{tpu_custom_call.1} parent=5 // pred_check
        %p178 = pneg %p177
      $region22: #{tpu_custom_call.1} parent=5 // pred_check_branch
        %180 = sbr.rel (%p178) target = $region24
      $region23: #{tpu_custom_call.1} parent=5 // pred_region
        // Predicated region
        $region25: #{tpu_custom_call.1} parent=23 // pred_check
          %p181 = pneg %p50
        $region26: #{tpu_custom_call.1} parent=23 // pred_check_branch
          %183 = sbr.rel (%p181) target = $region28
        $region27: #{tpu_custom_call.1} parent=23 // pred_region
          %s184 = sand.u32 %s40, 1
          %s185 = scalar_lea.sflag [#allocation3], %s184
          %s186 = sand.u32 %s40, 1
          %s187 = smul.addr %s186, 32
          %s188 = scalar_lea.vmem [#allocation2], %s187
          %s189 = smul.u32 4, %s24
          %s191 = ssub.s32 512, 512
          %192 = vsyncadd %s185, %s191
          %s193 = sadd.s32 %s23, %s189
          %s194 = smul.addr %s193, 128
          %s195 = scalar_lea.hbm %s0, %s194
          %s196 = sshll.u32 %s188, 4
          %s197 = int_to_ptr.vmem [resolvable:$true] %s196
          %202 = dma.hbm_to_vmem [thread:$0]  %s195, 512, %s197, %s185, 128, 128, 8
        $region28: #{tpu_custom_call.1} parent=23 // pred_fallthru
          _
      $region24: #{tpu_custom_call.1} parent=5 // pred_fallthru
        _
      %p203 = scmp.le.s32.totalorder 1, %s16
      %p204 = scmp.lt.s32.totalorder %s16, 3
      %p205 = pnand %p203, %p204
      %p206 = pneg %p205
      // Predicated region
      $region29: #{tpu_custom_call.1} parent=5 // pred_check
        _
      $region30: #{tpu_custom_call.1} parent=5 // pred_check_branch
        %208 = sbr.rel (%p205) target = $region32
      $region31: #{tpu_custom_call.1} parent=5 // pred_region
        %s209 = ssub.s32 %s16, 1
        %s210 = sand.u32 %s43, 1
        %s211 = scalar_lea.sflag [#allocation3], %s210
        %s212 = sand.u32 %s43, 1
        %s213 = smul.addr %s212, 32
        %s214 = scalar_lea.vmem [#allocation2], %s213
        // Predicated region
        $region33: #{tpu_custom_call.1} parent=31 // pred_check
          %p215 = pneg %p56
        $region34: #{tpu_custom_call.1} parent=31 // pred_check_branch
          %217 = sbr.rel (%p215) target = $region36
        $region35: #{tpu_custom_call.1} parent=31 // pred_region
          %218 = dma.done %s211, 512
        $region36: #{tpu_custom_call.1} parent=31 // pred_fallthru
          _
        // Predicated region
        $region37: #{tpu_custom_call.1} parent=31 // pred_check
          %p219 = pneg %p82
        $region38: #{tpu_custom_call.1} parent=31 // pred_check_branch
          %221 = sbr.rel (%p219) target = $region40
        $region39: #{tpu_custom_call.1} parent=31 // pred_region
          %222 = dma.done [#allocation6], 128
        $region40: #{tpu_custom_call.1} parent=31 // pred_fallthru
          _
        // Predicated region
        $region41: #{tpu_custom_call.1} parent=31 // pred_check
          %p223 = pneg %p108
        $region42: #{tpu_custom_call.1} parent=31 // pred_check_branch
          %225 = sbr.rel (%p223) target = $region44
        $region43: #{tpu_custom_call.1} parent=31 // pred_region
          %226 = dma.done [#allocation6], 128
        $region44: #{tpu_custom_call.1} parent=31 // pred_fallthru
          _
        %s227 = sand.u32 %s43, 1
        %s228 = scalar_lea.sflag [#allocation3], %s227
        %s229 = sand.u32 %s43, 1
        %s230 = smul.addr %s229, 32
        %s231 = scalar_lea.vmem [#allocation2], %s230
        %p232 = pneg %p56
        %p233 = pneg %p53
        %p234 = pneg %p82
        %p235 = pneg %p79
        %p236 = pneg %p108
        %p237 = pneg %p105
        %p238 = pneg %p136
        %p239 = pneg %p133
        %s240 = sand.u32 %s123, 1
        %s241 = scalar_lea.sflag [#allocation4], %s240
        %s242 = sand.u32 %s123, 1
        %s243 = smul.addr %s242, 32
        %s244 = scalar_lea.vmem [#allocation8], %s243
        %s245 = smul.u32 4, %s26
        %s246 = smul.u32 4, %s26
        %v247 = vld [vmem:[%s214] sm:$0xff]
        %v248 = vld [vmem:[%s214 + $0x8] sm:$0xff]
        %v249 = vld [vmem:[%s214 + $0x10] sm:$0xff]
        %v250 = vld [vmem:[%s214 + $0x18] sm:$0xff]
        %251 = vadd.xlane.f32.xlu0 %v247
        %v252 = vpop.xlane.xlu0 %251
        %253 = vadd.xlane.f32.xlu0 %v248
        %v254 = vpop.xlane.xlu0 %253
        %255 = vadd.xlane.f32.xlu0 %v249
        %v256 = vpop.xlane.xlu0 %255
        %257 = vadd.xlane.f32.xlu0 %v250
        %v258 = vpop.xlane.xlu0 %257
        %v259 = vrcp.pop 128.0
        %v260 = vmul.f32 %v252, %v259
        %v261 = vmul.f32 %v254, %v259
        %v262 = vmul.f32 %v256, %v259
        %v263 = vmul.f32 %v258, %v259
        %v264 = vsub.f32 %v247, %v260
        %v265 = vsub.f32 %v248, %v261
        %v266 = vsub.f32 %v249, %v262
        %v267 = vsub.f32 %v250, %v263
        %v268 = vmul.f32 %v264, %v264
        %v269 = vmul.f32 %v265, %v265
        %v270 = vmul.f32 %v266, %v266
        %v271 = vmul.f32 %v267, %v267
        %272 = vadd.xlane.f32.xlu0 %v268
        %v273 = vpop.xlane.xlu0 %272
        %274 = vadd.xlane.f32.xlu0 %v269
        %v275 = vpop.xlane.xlu0 %274
        %276 = vadd.xlane.f32.xlu0 %v270
        %v277 = vpop.xlane.xlu0 %276
        %278 = vadd.xlane.f32.xlu0 %v271
        %v279 = vpop.xlane.xlu0 %278
        %v280 = vmul.f32 %v273, %v259
        %v281 = vmul.f32 %v275, %v259
        %v282 = vmul.f32 %v277, %v259
        %v283 = vmul.f32 %v279, %v259
        %v284 = vadd.f32 %v280, 1e-05
        %v285 = vadd.f32 %v281, 1e-05
        %v286 = vadd.f32 %v282, 1e-05
        %v287 = vadd.f32 %v283, 1e-05
        %v288 = vrsqrt.pop %v284
        %v289 = vrsqrt.pop %v285
        %v290 = vrsqrt.pop %v286
        %v291 = vrsqrt.pop %v287
        %v292 = vld [vmem:[#allocation5] sm:$0xff]
        %v293 = vld [vmem:[#allocation7] sm:$0xff]
        %v294 = vmul.f32 %v264, %v288
        %v295 = vmul.f32 %v265, %v289
        %v296 = vmul.f32 %v266, %v290
        %v297 = vmul.f32 %v267, %v291
        %v298 = vmul.f32 %v292, %v294
        %v299 = vmul.f32 %v292, %v295
        %v300 = vmul.f32 %v292, %v296
        %v301 = vmul.f32 %v292, %v297
        %v302 = vadd.f32 %v298, %v293
        %v303 = vadd.f32 %v299, %v293
        %v304 = vadd.f32 %v300, %v293
        %v305 = vadd.f32 %v301, %v293
        %306 = vst [vmem:[%s244] sm:$0xff] %v302
        %307 = vst [vmem:[%s244 + $0x8] sm:$0xff] %v303
        %308 = vst [vmem:[%s244 + $0x10] sm:$0xff] %v304
        %309 = vst [vmem:[%s244 + $0x18] sm:$0xff] %v305
        %s310 = sand.u32 %s123, 1
        %s311 = scalar_lea.sflag [#allocation4], %s310
        %s312 = sand.u32 %s123, 1
        %s313 = smul.addr %s312, 32
        %s314 = scalar_lea.vmem [#allocation8], %s313
        // Predicated region
        $region45: #{tpu_custom_call.1} parent=31 // pred_check
          %p315 = pneg %p133
        $region46: #{tpu_custom_call.1} parent=31 // pred_check_branch
          %317 = sbr.rel (%p315) target = $region48
        $region47: #{tpu_custom_call.1} parent=31 // pred_region
          %s318 = smul.u32 4, %s26
          %s320 = ssub.s32 512, 512
          %321 = vsyncadd %s311, %s320
          %s322 = sadd.s32 %s25, %s318
          %s323 = smul.addr %s322, 128
          %s324 = scalar_lea.hbm %s3, %s323
          %s325 = sshll.u32 %s314, 4
          %s326 = int_to_ptr.vmem [resolvable:$true] %s325
          %331 = dma.vmem_to_hbm [thread:$0]  %s326, 512, %s324, %s311, 128, 128, 8
        $region48: #{tpu_custom_call.1} parent=31 // pred_fallthru
          _
      $region32: #{tpu_custom_call.1} parent=5 // pred_fallthru
        _
      %p332 = scmp.le.s32.totalorder 2, %s16
      // Predicated region
      $region49: #{tpu_custom_call.1} parent=5 // pred_check
        %p333 = pneg %p332
      $region50: #{tpu_custom_call.1} parent=5 // pred_check_branch
        %335 = sbr.rel (%p333) target = $region52
      $region51: #{tpu_custom_call.1} parent=5 // pred_region
        %s336 = ssub.s32 %s16, 2
        // Predicated region
        $region53: #{tpu_custom_call.1} parent=51 // pred_check
          %p337 = pneg %p139
        $region54: #{tpu_custom_call.1} parent=51 // pred_check_branch
          %339 = sbr.rel (%p337) target = $region56
        $region55: #{tpu_custom_call.1} parent=51 // pred_region
          %s340 = sand.u32 %s124, 1
          %s341 = scalar_lea.sflag [#allocation4], %s340
          %s342 = sand.u32 %s124, 1
          %s343 = smul.addr %s342, 32
          %s344 = scalar_lea.vmem [#allocation8], %s343
          %345 = dma.done %s341, 512
        $region56: #{tpu_custom_call.1} parent=51 // pred_fallthru
          _
      $region52: #{tpu_custom_call.1} parent=5 // pred_fallthru
        _
    $region6: #{tpu_custom_call.1} parent=1 // loop_footer
      %s20 = sadd.s32 1, %s16
    $region7: #{tpu_custom_call.1} parent=1 // loop_footer_branch
      %15 = sbr.rel target = $region3
    $region8: #{tpu_custom_call.1} parent=1 // loop_exit
      _
    %346 = vsyncpa [#allocation3], 1
    %s347 = scalar_lea.sflag [#allocation3], 1
    %348 = vsyncpa %s347, 1
    %349 = vsyncpa [#allocation6], 1
    %350 = vsyncpa [#allocation4], 1
    %s351 = scalar_lea.sflag [#allocation4], 1
    %352 = vsyncpa %s351, 1

</llo_original>
